<compile_context>
chip_gen: v7x
topology: tpu7x:2x2x1
jax: 0.10.0
libtpu: 0.0.40
codegen_flags: <defaults>
</compile_context>

<pallas_src>
import functools
import math

import jax
import jax.numpy as jnp
from jax.experimental import pallas as pl
from jax.experimental.pallas import tpu as pltpu

NUM_ENTRIES = 2
HIDDEN = 64
SKIP_WIDTH = HIDDEN - NUM_ENTRIES  # 62
INV_SQRT2 = 1.0 / math.sqrt(2.0)

# Per-point cost (advisory, for pl.CostEstimate).
_FLOPS_PER_POINT = (
    2 * NUM_ENTRIES * HIDDEN          # layer 0 (VPU FMAs)
    + 2 * HIDDEN * HIDDEN * 3         # layers 1, 2, 3a (MXU)
    + 2 * NUM_ENTRIES * HIDDEN        # layer 3 points term (VPU FMAs)
    + 2 * HIDDEN * 8                  # layer 4 (8-row-padded MXU)
)
_TRANSC_PER_POINT = 4 * HIDDEN        # 4 tanh layers of width 64


def _supports_bf16_transcendentals():
    """True on v6e/v7x (bf16 EUP/VPU/MXU path), False on v5e and older/unknown."""
    try:
        dev = jax.devices()[0]
        if dev.platform != "tpu":
            return False
        kind = dev.device_kind.lower()
    except Exception:
        return False
    # TODO(synk): switch to pltpu.get_tpu_info()/ChipVersion once its fields are stable.
    return any(tag in kind for tag in ("v6", "v7", "7x"))


def _sdf2_kernel(pts_ref, w_hid_ref, w_small_ref, w_out_ref, out_ref, *, fast):
    """Feature-major layout: pts (2, TN), activations (64, TN), output (1, TN).

    fast=True: bf16 tanh (EUP ~2x) and bf16 activations/weights into the hidden
    MXU dots (f32 accumulate).  fast=False: exact f32 path.
    """
    f32 = jnp.float32
    act_dtype = jnp.bfloat16 if fast else f32

    def act(x):
        return jnp.tanh(x.astype(act_dtype))

    pts = pts_ref[...].astype(f32)                    # (2, TN)
    p0 = pts[0:1, :]                                  # (1, TN)
    p1 = pts[1:2, :]

    small = w_small_ref[...]                          # (64, 8) f32
    w0c0, w0c1 = small[:, 0:1], small[:, 1:2]         # layer-0 weight columns
    w3c0, w3c1 = small[:, 2:3], small[:, 3:4]         # layer-3 points-part columns
    b0, b1 = small[:, 4:5], small[:, 5:6]
    b2, b3 = small[:, 6:7], small[:, 7:8]

    # layer 0: K=2 contraction as VPU outer-product FMAs (MXU depth-2 would
    # waste a full systolic pass; VALU slots are idle in this EUP-bound kernel).
    h = act(w0c0 * p0 + w0c1 * p1 + b0)                                   # (64, TN)
    # layer 1: (64,64) @ (64,TN)
    h = act(jnp.dot(w_hid_ref[0], h, preferred_element_type=f32) + b1)
    # layer 2: true out width 62, zero-padded to 64 (pad rows -> tanh(0)=0)
    h = act(jnp.dot(w_hid_ref[1], h, preferred_element_type=f32) + b2)
    # layer 3 with skip, folded exactly: (W3a @ h2 + W3b @ p) / sqrt(2) + b3.
    # W3a has zero columns matching h2's zero pad rows; W3b term is a K=2 FMA.
    x3 = (jnp.dot(w_hid_ref[2], h, preferred_element_type=f32)
          + (w3c0 * p0 + w3c1 * p1)) * INV_SQRT2 + b3
    h = act(x3)
    # layer 4 (no activation): (8,64) @ (64,TN).  Only row 0 holds the real w4
    # (rows 1..7 are zero) so the MXU M-dim stays sublane-aligned; b4 is stored
    # replicated down column HIDDEN so the bias add is a plain lane broadcast.
    out8 = (jnp.dot(w_out_ref[:, 0:HIDDEN], h.astype(f32),
                    preferred_element_type=f32)
            + w_out_ref[:, HIDDEN:HIDDEN + 1])                            # (8, TN)
    out_ref[...] = out8[0:1, :].astype(out_ref.dtype)


def sdf2_forward_pallas(points, params, *, tile_n=8192, precision=None,
                        points_transposed=False):
    """SDF2 forward.

    points: (N, 2) float32 — or (2, N) if points_transposed=True (skips the
            wrapper-side transpose HBM pass).
    params: (w_hid (3,64,64), w_small (64,8), w_out (8,65)) from init_sdf2_params.
    precision: None -> auto (bf16 fast path on v6e/v7x, f32 elsewhere),
               "f32" -> exact path, "bf16" -> force fast path.
    Returns (N, 1) float32.
    """
    if precision is None:
        fast = _supports_bf16_transcendentals()
    else:
        fast = (precision == "bf16")

    if points_transposed:
        pts_t = points
        d, n = pts_t.shape
    else:
        n, d = points.shape
        # NOTE: this transpose is a small standalone HBM pass (~16 B/point);
        # callers that already hold (2, N) data should set points_transposed=True.
        pts_t = points.T
    assert d == NUM_ENTRIES
    pts_t = pts_t.astype(jnp.float32)

    w_hid, w_small, w_out = params
    if fast:
        # bf16 x bf16 MXU passes for the hidden layers (v6e/v7x native).
        w_hid = w_hid.astype(jnp.bfloat16)

    # Tile sizing: large tiles amortize the ~0.35us/grid-step overhead; the cap
    # keeps >= 2 grid steps so both v7x TensorCores get work, and small inputs
    # are not over-padded.
    tile_n = int(tile_n)
    tile_n = min(tile_n, pl.cdiv(n, 2 * 128) * 128)
    tile_n = max(128, pl.cdiv(tile_n, 128) * 128)
    n_tiles = pl.cdiv(n, tile_n)
    # Prefer an even grid-step count (v7x megacore load balance).
    if n_tiles > 1 and n_tiles % 2 == 1:
        alt = pl.cdiv(pl.cdiv(n, n_tiles + 1), 128) * 128
        if alt >= 128 and pl.cdiv(n, alt) % 2 == 0:
            tile_n, n_tiles = alt, pl.cdiv(n, alt)

    # No wrapper-side padding: the last block may be partial.  Pallas masks the
    # out-of-bounds output lanes; garbage OOB input lanes stay lane-local since
    # every op is elementwise or contracts over the feature (sublane) axis.
    weight_bytes = sum(int(w.size) * w.dtype.itemsize for w in (w_hid, w_small, w_out))
    cost = pl.CostEstimate(
        flops=_FLOPS_PER_POINT * n,
        transcendentals=_TRANSC_PER_POINT * n,
        bytes_accessed=4 * (NUM_ENTRIES + 1) * n + weight_bytes,
    )

    def full(shape):
        return pl.BlockSpec(shape, lambda i, _s=len(shape): (0,) * _s)

    out = pl.pallas_call(
        functools.partial(_sdf2_kernel, fast=fast),
        out_shape=jax.ShapeDtypeStruct((1, n), jnp.float32),
        grid_spec=pltpu.PrefetchScalarGridSpec(
            num_scalar_prefetch=0,
            grid=(n_tiles,),
            in_specs=[
                pl.BlockSpec((NUM_ENTRIES, tile_n), lambda i: (0, i)),  # points
                full(w_hid.shape),                                      # hidden weights
                full(w_small.shape),                                    # w0/w3b/biases
                full(w_out.shape),                                      # w4/b4
            ],
            out_specs=pl.BlockSpec((1, tile_n), lambda i: (0, i)),      # lane-dense
        ),
        compiler_params=pltpu.CompilerParams(
            dimension_semantics=("parallel",),
            vmem_limit_bytes=32 * 1024 * 1024,   # lifts v5e's 16MiB scoped default
        ),
        cost_estimate=cost,
    )(pts_t, w_hid, w_small, w_out)
    return out.reshape(n, 1)


def init_sdf2_params(key, *, hidden=HIDDEN, num_entries=NUM_ENTRIES, last_bias=0.5):
    """Deterministic synthetic parameters matching SDF2's shapes.

    `raw` weights are stored as (in, out) (transposed vs. torch.nn.Linear) so the
    reference computes x @ W + b.  The packed form is what the kernel expects:
      w_hid  (3,64,64): [W1^T, W2^T zero-padded to 64 out-rows, W3a^T with zero
                          columns for the pad rows]           (out, in) layout
      w_small (64, 8):  [w0 col0, w0 col1, w3b col0, w3b col1, b0, b1, b2, b3]
      w_out   (8, 65):  row 0 cols 0..63 = w4, col 64 = b4 (replicated), rest 0
    weight_norm is an identity at init (g = ||v||), so no extra reparam needed.
    """
    dims = [num_entries] + [hidden] * 4 + [1]
    skip = (3,)
    keys = jax.random.split(key, 2 * (len(dims) - 1))
    raw = {}
    for l in range(len(dims) - 1):
        in_dim = dims[l]
        out_dim = dims[l + 1] - dims[0] if (l + 1) in skip else dims[l + 1]
        kw, kb = keys[2 * l], keys[2 * l + 1]
        if l == len(dims) - 2:
            mean = math.sqrt(math.pi / in_dim)
            w = mean + 1e-4 * jax.random.normal(kw, (in_dim, out_dim), jnp.float32)
            b = jnp.full((out_dim,), last_bias, jnp.float32)
        else:
            bound = 1.0 / math.sqrt(in_dim)
            w = jax.random.uniform(kw, (in_dim, out_dim), jnp.float32, -bound, bound)
            b = jax.random.uniform(kb, (out_dim,), jnp.float32, -bound, bound)
        raw[f"w{l}"] = w
        raw[f"b{l}"] = b

    # ---- pack into the consolidated, feature-major form the kernel expects ----
    w0t = raw["w0"].T                                          # (64, 2)
    w1t = raw["w1"].T                                          # (64, 64)
    w2t = jnp.pad(raw["w2"].T, ((0, num_entries), (0, 0)))     # (64, 64), pad rows 0
    w3 = raw["w3"]                                             # (64, 64) (in, out)
    w3a_t = jnp.pad(w3[:SKIP_WIDTH, :].T, ((0, 0), (0, num_entries)))  # (64, 64)
    w3b_t = w3[SKIP_WIDTH:, :].T                               # (64, 2)
    w4t = raw["w4"].T                                          # (1, 64)

    w_hid = jnp.stack([w1t, w2t, w3a_t], axis=0)               # (3, 64, 64)
    w_small = jnp.concatenate(
        [w0t, w3b_t,
         raw["b0"][:, None], raw["b1"][:, None],
         jnp.pad(raw["b2"], (0, num_entries))[:, None],
         raw["b3"][:, None]], axis=1)                          # (64, 8)
    w_out = jnp.zeros((8, hidden + 1), jnp.float32)
    w_out = w_out.at[0, :hidden].set(w4t[0])
    w_out = w_out.at[:, hidden].set(raw["b4"][0])              # b4 replicated
    packed = (w_hid, w_small, w_out)
    return raw, packed


def sdf2_forward_ref(points, raw):
    """Pure-JAX reference mirroring the PyTorch forward exactly."""
    x = points
    x = jnp.tanh(x @ raw["w0"] + raw["b0"])
    x = jnp.tanh(x @ raw["w1"] + raw["b1"])
    x = jnp.tanh(x @ raw["w2"] + raw["b2"])
    x = jnp.concatenate([x, points], axis=1) / math.sqrt(2.0)
    x = jnp.tanh(x @ raw["w3"] + raw["b3"])
    return x @ raw["w4"] + raw["b4"]


if __name__ == "__main__":
    key = jax.random.PRNGKey(0)
    k_pts, k_params, k_rag = jax.random.split(key, 3)

    raw, packed = init_sdf2_params(k_params)

    n_points = 256
    points = jax.random.uniform(k_pts, (n_points, NUM_ENTRIES), jnp.float32,
                                -1.0, 1.0)
    ref = sdf2_forward_ref(points, raw)

    # 1) Exact (f32) path on every chip generation.  Typical max error ~1e-6;
    #    the loose bound only allows for XLA's default TPU f32 matmul using
    #    bf16 passes while Mosaic may use full-precision passes (or vice versa).
    out32 = jax.block_until_ready(
        sdf2_forward_pallas(points, packed, precision="f32"))
    assert out32.shape == (n_points, 1), out32.shape
    err32 = float(jnp.max(jnp.abs(out32 - ref)))
    assert err32 < 2e-2, err32

    # 2) Default (auto) path: bf16 tanh + bf16 MXU activations on v6e/v7x,
    #    identical f32 path elsewhere.  Loose tolerance by design.
    out_auto = jax.block_until_ready(sdf2_forward_pallas(points, packed))
    err_auto = float(jnp.max(jnp.abs(out_auto - ref)))
    assert out_auto.shape == (n_points, 1), out_auto.shape
    assert err_auto < 1e-1, err_auto

    # 3) Ragged N (not a multiple of the 128-lane tile): exercises the partial
    #    last block now that the wrapper-side jnp.pad pass is gone.
    n_rag = 250
    pts_rag = jax.random.uniform(k_rag, (n_rag, NUM_ENTRIES), jnp.float32,
                                 -1.0, 1.0)
    out_rag = jax.block_until_ready(
        sdf2_forward_pallas(pts_rag, packed, precision="f32"))
    err_rag = float(jnp.max(jnp.abs(out_rag - sdf2_forward_ref(pts_rag, raw))))
    assert out_rag.shape == (n_rag, 1), out_rag.shape
    assert err_rag < 2e-2, err_rag

    print("KERNEL_OK")
</pallas_src>

<mosaic_0001>
module attributes {stable_mosaic.version = 11 : i64} {
  func.func @_sdf2_kernel(%arg0: i32, %arg1: memref<2x128xf32, #tpu.memory_space<vmem>>, %arg2: memref<3x64x64xf32, #tpu.memory_space<vmem>>, %arg3: memref<64x8xf32, #tpu.memory_space<vmem>>, %arg4: memref<8x65xf32, #tpu.memory_space<vmem>>, %arg5: memref<1x128xf32, #tpu.memory_space<vmem>>) attributes {dimension_semantics = [#tpu.dimension_semantics<parallel>], iteration_bounds = array<i64: 2>, scalar_prefetch = 0 : i64, scratch_operands = 0 : i64, tpu.core_type = #tpu.core_type<tc>, window_params = [{transform_indices = @transform_0, window_bounds = array<i64: 2, 128>}, {pipeline_mode = #tpu.pipeline_mode<synchronous>, transform_indices = @transform_1, window_bounds = array<i64: 3, 64, 64>}, {pipeline_mode = #tpu.pipeline_mode<synchronous>, transform_indices = @transform_2, window_bounds = array<i64: 64, 8>}, {pipeline_mode = #tpu.pipeline_mode<synchronous>, transform_indices = @transform_3, window_bounds = array<i64: 8, 65>}, {transform_indices = @transform_4, window_bounds = array<i64: 1, 128>}]} {
    %c0 = arith.constant 0 : index
    %c0_0 = arith.constant 0 : index
    %0 = vector.load %arg1[%c0, %c0_0] : memref<2x128xf32, #tpu.memory_space<vmem>>, vector<2x128xf32>
    %1 = vector.extract_strided_slice %0 {offsets = [0, 0], sizes = [1, 128], strides = [1, 1]} : vector<2x128xf32> to vector<1x128xf32>
    %2 = vector.extract_strided_slice %0 {offsets = [1, 0], sizes = [1, 128], strides = [1, 1]} : vector<2x128xf32> to vector<1x128xf32>
    %c0_1 = arith.constant 0 : index
    %c0_2 = arith.constant 0 : index
    %3 = vector.load %arg3[%c0_1, %c0_2] : memref<64x8xf32, #tpu.memory_space<vmem>>, vector<64x8xf32>
    %4 = vector.extract_strided_slice %3 {offsets = [0, 0], sizes = [64, 1], strides = [1, 1]} : vector<64x8xf32> to vector<64x1xf32>
    %5 = vector.extract_strided_slice %3 {offsets = [0, 1], sizes = [64, 1], strides = [1, 1]} : vector<64x8xf32> to vector<64x1xf32>
    %6 = vector.extract_strided_slice %3 {offsets = [0, 2], sizes = [64, 1], strides = [1, 1]} : vector<64x8xf32> to vector<64x1xf32>
    %7 = vector.extract_strided_slice %3 {offsets = [0, 3], sizes = [64, 1], strides = [1, 1]} : vector<64x8xf32> to vector<64x1xf32>
    %8 = vector.extract_strided_slice %3 {offsets = [0, 4], sizes = [64, 1], strides = [1, 1]} : vector<64x8xf32> to vector<64x1xf32>
    %9 = vector.extract_strided_slice %3 {offsets = [0, 5], sizes = [64, 1], strides = [1, 1]} : vector<64x8xf32> to vector<64x1xf32>
    %10 = vector.extract_strided_slice %3 {offsets = [0, 6], sizes = [64, 1], strides = [1, 1]} : vector<64x8xf32> to vector<64x1xf32>
    %11 = vector.extract_strided_slice %3 {offsets = [0, 7], sizes = [64, 1], strides = [1, 1]} : vector<64x8xf32> to vector<64x1xf32>
    %12 = vector.broadcast %4 : vector<64x1xf32> to vector<64x128xf32>
    %13 = vector.broadcast %1 : vector<1x128xf32> to vector<64x128xf32>
    %14 = arith.mulf %12, %13 : vector<64x128xf32>
    %15 = vector.broadcast %5 : vector<64x1xf32> to vector<64x128xf32>
    %16 = vector.broadcast %2 : vector<1x128xf32> to vector<64x128xf32>
    %17 = arith.mulf %15, %16 : vector<64x128xf32>
    %18 = arith.addf %14, %17 : vector<64x128xf32>
    %19 = vector.broadcast %8 : vector<64x1xf32> to vector<64x128xf32>
    %20 = arith.addf %18, %19 : vector<64x128xf32>
    %21 = math.tanh %20 : vector<64x128xf32>
    %c0_3 = arith.constant 0 : index
    %c0_4 = arith.constant 0 : index
    %c0_5 = arith.constant 0 : index
    %22 = vector.load %arg2[%c0_3, %c0_4, %c0_5] : memref<3x64x64xf32, #tpu.memory_space<vmem>>, vector<1x64x64xf32>
    %23 = vector.shape_cast %22 : vector<1x64x64xf32> to vector<64x64xf32>
    %cst = arith.constant dense<0.000000e+00> : vector<64x128xf32>
    %24 = tpu.matmul %23, %21, %cst {dimension_numbers = #tpu.dot_dimension_numbers<[1], [0], [0], [1], [0, 0, 1, 1], [], []>} : vector<64x64xf32>, vector<64x128xf32>, vector<64x128xf32> -> vector<64x128xf32>
    %25 = vector.broadcast %9 : vector<64x1xf32> to vector<64x128xf32>
    %26 = arith.addf %24, %25 : vector<64x128xf32>
    %27 = math.tanh %26 : vector<64x128xf32>
    %c1 = arith.constant 1 : index
    %c0_6 = arith.constant 0 : index
    %c0_7 = arith.constant 0 : index
    %28 = vector.load %arg2[%c1, %c0_6, %c0_7] : memref<3x64x64xf32, #tpu.memory_space<vmem>>, vector<1x64x64xf32>
    %29 = vector.shape_cast %28 : vector<1x64x64xf32> to vector<64x64xf32>
    %cst_8 = arith.constant dense<0.000000e+00> : vector<64x128xf32>
    %30 = tpu.matmul %29, %27, %cst_8 {dimension_numbers = #tpu.dot_dimension_numbers<[1], [0], [0], [1], [0, 0, 1, 1], [], []>} : vector<64x64xf32>, vector<64x128xf32>, vector<64x128xf32> -> vector<64x128xf32>
    %31 = vector.broadcast %10 : vector<64x1xf32> to vector<64x128xf32>
    %32 = arith.addf %30, %31 : vector<64x128xf32>
    %33 = math.tanh %32 : vector<64x128xf32>
    %c2 = arith.constant 2 : index
    %c0_9 = arith.constant 0 : index
    %c0_10 = arith.constant 0 : index
    %34 = vector.load %arg2[%c2, %c0_9, %c0_10] : memref<3x64x64xf32, #tpu.memory_space<vmem>>, vector<1x64x64xf32>
    %35 = vector.shape_cast %34 : vector<1x64x64xf32> to vector<64x64xf32>
    %cst_11 = arith.constant dense<0.000000e+00> : vector<64x128xf32>
    %36 = tpu.matmul %35, %33, %cst_11 {dimension_numbers = #tpu.dot_dimension_numbers<[1], [0], [0], [1], [0, 0, 1, 1], [], []>} : vector<64x64xf32>, vector<64x128xf32>, vector<64x128xf32> -> vector<64x128xf32>
    %37 = vector.broadcast %6 : vector<64x1xf32> to vector<64x128xf32>
    %38 = vector.broadcast %1 : vector<1x128xf32> to vector<64x128xf32>
    %39 = arith.mulf %37, %38 : vector<64x128xf32>
    %40 = vector.broadcast %7 : vector<64x1xf32> to vector<64x128xf32>
    %41 = vector.broadcast %2 : vector<1x128xf32> to vector<64x128xf32>
    %42 = arith.mulf %40, %41 : vector<64x128xf32>
    %43 = arith.addf %39, %42 : vector<64x128xf32>
    %44 = arith.addf %36, %43 : vector<64x128xf32>
    %cst_12 = arith.constant 0.707106769 : f32
    %45 = vector.broadcast %cst_12 : f32 to vector<64x128xf32>
    %46 = arith.mulf %44, %45 : vector<64x128xf32>
    %47 = vector.broadcast %11 : vector<64x1xf32> to vector<64x128xf32>
    %48 = arith.addf %46, %47 : vector<64x128xf32>
    %49 = math.tanh %48 : vector<64x128xf32>
    %c0_13 = arith.constant 0 : index
    %c0_14 = arith.constant 0 : index
    %50 = vector.load %arg4[%c0_13, %c0_14] : memref<8x65xf32, #tpu.memory_space<vmem>>, vector<8x64xf32>
    %cst_15 = arith.constant dense<0.000000e+00> : vector<8x128xf32>
    %51 = tpu.matmul %50, %49, %cst_15 {dimension_numbers = #tpu.dot_dimension_numbers<[1], [0], [0], [1], [0, 0, 1, 1], [], []>} : vector<8x64xf32>, vector<64x128xf32>, vector<8x128xf32> -> vector<8x128xf32>
    %c0_16 = arith.constant 0 : index
    %c64 = arith.constant 64 : index
    %52 = vector.load %arg4[%c0_16, %c64] : memref<8x65xf32, #tpu.memory_space<vmem>>, vector<8x1xf32>
    %53 = vector.broadcast %52 : vector<8x1xf32> to vector<8x128xf32>
    %54 = arith.addf %51, %53 : vector<8x128xf32>
    %55 = vector.extract_strided_slice %54 {offsets = [0, 0], sizes = [1, 128], strides = [1, 1]} : vector<8x128xf32> to vector<1x128xf32>
    %c0_17 = arith.constant 0 : index
    %c0_18 = arith.constant 0 : index
    %56 = vector.load %arg5[%c0_17, %c0_18] : memref<1x128xf32, #tpu.memory_space<vmem>>, vector<1x128xf32>
    tpu.vector_store %arg5[%c0_17, %c0_18], %55 {strides = array<i32>} : memref<1x128xf32, #tpu.memory_space<vmem>>, vector<1x128xf32>,
    return
  }
  func.func @transform_0(%arg0: i32) -> (i32, i32) {
    %c0_i32 = arith.constant 0 : i32
    %c0_i32_0 = arith.constant 0 : i32
    return %c0_i32, %arg0 : i32, i32
  }
  func.func @transform_1(%arg0: i32) -> (i32, i32, i32) {
    %c0_i32 = arith.constant 0 : i32
    %c0_i32_0 = arith.constant 0 : i32
    %c0_i32_1 = arith.constant 0 : i32
    %c0_i32_2 = arith.constant 0 : i32
    return %c0_i32, %c0_i32_0, %c0_i32_1 : i32, i32, i32
  }
  func.func @transform_2(%arg0: i32) -> (i32, i32) {
    %c0_i32 = arith.constant 0 : i32
    %c0_i32_0 = arith.constant 0 : i32
    %c0_i32_1 = arith.constant 0 : i32
    return %c0_i32, %c0_i32_0 : i32, i32
  }
  func.func @transform_3(%arg0: i32) -> (i32, i32) {
    %c0_i32 = arith.constant 0 : i32
    %c0_i32_0 = arith.constant 0 : i32
    %c0_i32_1 = arith.constant 0 : i32
    return %c0_i32, %c0_i32_0 : i32, i32
  }
  func.func @transform_4(%arg0: i32) -> (i32, i32) {
    %c0_i32 = arith.constant 0 : i32
    %c0_i32_0 = arith.constant 0 : i32
    return %c0_i32, %arg0 : i32, i32
  }
}

</mosaic_0001>

<llo_original>
// kernel: tpu_custom_call.1
$region0: #{tpu_custom_call.1}
  #allocation0 [shape = 'u32[]', space=smem, size = 0x4, offset = 0x4, fixed_abs, tag = 'smem constant byte address 0x4 - core index']
  #allocation1 [shape = 'u32[144,128]{1,0:T(1,128)}', space=vmem, size = 0x12000, scoped, tag = 'internal scratch']
  %s0 = inlined_call_operand.vmem [shape: f32[2,256], index: 0, kind: input, shape index: {}]
  %s1 = inlined_call_operand.hbm [shape: f32[3,64,64], index: 1, kind: input, shape index: {}]
  %s2 = inlined_call_operand.vmem [shape: f32[64,8], index: 2, kind: input, shape index: {}]
  %s3 = inlined_call_operand.vmem [shape: f32[8,65], index: 3, kind: input, shape index: {}]
  %s4 = inlined_call_operand.hbm [shape: f32[1,256], index: 4, kind: output, shape index: {}]
  %s5 = sld [smem:[#allocation0]]
  $region53: #{tpu_custom_call.1} parent=0
    _
  %s7 = ssub.s32 1, %s5
  %s8 = scalar_select 0, %s7, %s5
  $region1: #{tpu_custom_call.1} parent=0
    #allocation2 [shape = 'u8[98304]{0}', space=vmem, size = 0x18000, scoped, tag = 'input window, operand 1, single buffered']
    #allocation3 [shape = 's32[2]{0}', space=sflag, size = 0x8, scoped, tag = 'scoped memory for tpu_custom_call.1']
    #allocation4 [shape = 's32[2]{0}', space=sflag, size = 0x8, scoped, tag = 'scoped memory for tpu_custom_call.1']
    #allocation5 [shape = 'u8[1024]{0}', space=vmem, size = 0x400, scoped, tag = 'output window, operand 0']
    %9 = vsyncpa [#allocation3], 0
    %10 = vsyncpa [#allocation4], 0
    %s11 = scalar_lea.sflag [#allocation4], 1
    %12 = vsyncpa %s11, 0
    loop: start=0, step=1, limit=4
    $region2: #{tpu_custom_call.1} parent=1 // loop_pre_header
      _
    $region3: #{tpu_custom_call.1} parent=1 // loop_header
      %s14 = sphi 0, %s18
      %p15 = scmp.ge.s32.totalorder %s14, 4
      %s24 = sphi 0, %s26
      %s27 = sphi 0, %s24
      %s28 = sphi 0, %s27
      %s44 = sphi 0, %s28
      %s48 = sphi 0, %s48
      %s50 = sphi 0, %s48
      %s51 = sphi 0, %s50
      %s65 = sphi 0, %s51
      %s69 = sphi 0, %s69
      %s71 = sphi 0, %s69
      %s72 = sphi 0, %s71
      %s86 = sphi 0, %s72
      %s90 = sphi 0, %s90
      %s92 = sphi 0, %s90
      %s93 = sphi 0, %s92
      %s107 = sphi 0, %s93
      %s113 = sphi 0, %s115
      %s116 = sphi 0, %s113
      %s117 = sphi 0, %s116
      %s133 = sphi 0, %s117
    $region4: #{tpu_custom_call.1} parent=1 // loop_header_branch
      %17 = sbr.rel (%p15) target = $region8
    $region5: #{tpu_custom_call.1} parent=1 // loop_body
      %s19 = ssub.s32 %s14, 1
      %s20 = ssub.s32 %s14, 2
      %s21 = sadd.s32 %s14, 1
      %s22 = ssub.s32 %s14, %s21
      %p23 = scmp.eq.s32.totalorder %s22, 0
      %s25 = sadd.s32 %s24, 1
      %s26 = scalar_select %p23, %s24, %s25
      %p29 = pneg %p23
      %p30 = scmp.eq.s32.totalorder %s14, 1
      %p31 = por %p29, %p30
      %p32 = scmp.ne.s32.totalorder %s24, %s27
      %p33 = scmp.eq.s32.totalorder %s14, 0
      %p34 = por %p32, %p33
      %p35 = scmp.ne.s32.totalorder %s24, %s27
      %p36 = scmp.eq.s32.totalorder %s19, 1
      %p37 = por %p35, %p36
      %p38 = scmp.ne.s32.totalorder %s27, %s28
      %p39 = scmp.eq.s32.totalorder %s19, 0
      %p40 = por %p38, %p39
      %p41 = scmp.ne.s32.totalorder %s27, %s28
      %p42 = scmp.eq.s32.totalorder %s20, 1
      %p43 = por %p41, %p42
      %p45 = scmp.ne.s32.totalorder %s28, %s44
      %p46 = scmp.eq.s32.totalorder %s20, 0
      %p47 = por %p45, %p46
      %s49 = sadd.s32 %s48, 1
      %p52 = scmp.eq.s32.totalorder %s14, 1
      %p53 = scmp.ne.s32.totalorder %s48, %s50
      %p54 = scmp.eq.s32.totalorder %s14, 0
      %p55 = por %p53, %p54
      %p56 = scmp.ne.s32.totalorder %s48, %s50
      %p57 = scmp.eq.s32.totalorder %s19, 1
      %p58 = por %p56, %p57
      %p59 = scmp.ne.s32.totalorder %s50, %s51
      %p60 = scmp.eq.s32.totalorder %s19, 0
      %p61 = por %p59, %p60
      %p62 = scmp.ne.s32.totalorder %s50, %s51
      %p63 = scmp.eq.s32.totalorder %s20, 1
      %p64 = por %p62, %p63
      %p66 = scmp.ne.s32.totalorder %s51, %s65
      %p67 = scmp.eq.s32.totalorder %s20, 0
      %p68 = por %p66, %p67
      %s70 = sadd.s32 %s69, 1
      %p73 = scmp.eq.s32.totalorder %s14, 1
      %p74 = scmp.ne.s32.totalorder %s69, %s71
      %p75 = scmp.eq.s32.totalorder %s14, 0
      %p76 = por %p74, %p75
      %p77 = scmp.ne.s32.totalorder %s69, %s71
      %p78 = scmp.eq.s32.totalorder %s19, 1
      %p79 = por %p77, %p78
      %p80 = scmp.ne.s32.totalorder %s71, %s72
      %p81 = scmp.eq.s32.totalorder %s19, 0
      %p82 = por %p80, %p81
      %p83 = scmp.ne.s32.totalorder %s71, %s72
      %p84 = scmp.eq.s32.totalorder %s20, 1
      %p85 = por %p83, %p84
      %p87 = scmp.ne.s32.totalorder %s72, %s86
      %p88 = scmp.eq.s32.totalorder %s20, 0
      %p89 = por %p87, %p88
      %s91 = sadd.s32 %s90, 1
      %p94 = scmp.eq.s32.totalorder %s14, 1
      %p95 = scmp.ne.s32.totalorder %s90, %s92
      %p96 = scmp.eq.s32.totalorder %s14, 0
      %p97 = por %p95, %p96
      %p98 = scmp.ne.s32.totalorder %s90, %s92
      %p99 = scmp.eq.s32.totalorder %s19, 1
      %p100 = por %p98, %p99
      %p101 = scmp.ne.s32.totalorder %s92, %s93
      %p102 = scmp.eq.s32.totalorder %s19, 0
      %p103 = por %p101, %p102
      %p104 = scmp.ne.s32.totalorder %s92, %s93
      %p105 = scmp.eq.s32.totalorder %s20, 1
      %p106 = por %p104, %p105
      %p108 = scmp.ne.s32.totalorder %s93, %s107
      %p109 = scmp.eq.s32.totalorder %s20, 0
      %p110 = por %p108, %p109
      %s111 = ssub.s32 %s14, %s21
      %p112 = scmp.eq.s32.totalorder %s111, 0
      %s114 = sadd.s32 %s113, 1
      %s115 = scalar_select %p112, %s113, %s114
      %p118 = pneg %p112
      %p119 = scmp.eq.s32.totalorder %s14, 1
      %p120 = por %p118, %p119
      %p121 = scmp.ne.s32.totalorder %s113, %s116
      %p122 = scmp.eq.s32.totalorder %s14, 0
      %p123 = por %p121, %p122
      %p124 = scmp.ne.s32.totalorder %s113, %s116
      %p125 = scmp.eq.s32.totalorder %s19, 1
      %p126 = por %p124, %p125
      %p127 = scmp.ne.s32.totalorder %s116, %s117
      %p128 = scmp.eq.s32.totalorder %s19, 0
      %p129 = por %p127, %p128
      %p130 = scmp.ne.s32.totalorder %s116, %s117
      %p131 = scmp.eq.s32.totalorder %s20, 1
      %p132 = por %p130, %p131
      %p134 = scmp.ne.s32.totalorder %s117, %s133
      %p135 = scmp.eq.s32.totalorder %s20, 0
      %p136 = por %p134, %p135
      %p137 = scmp.le.s32.totalorder 1, %s14
      %p138 = scmp.lt.s32.totalorder %s14, 3
      %p139 = pnand %p137, %p138
      %p140 = pneg %p139
      // Predicated region
      $region9: #{tpu_custom_call.1} parent=5 // pred_check
        _
      $region10: #{tpu_custom_call.1} parent=5 // pred_check_branch
        %142 = sbr.rel (%p139) target = $region12
      $region11: #{tpu_custom_call.1} parent=5 // pred_region
        %s143 = ssub.s32 %s14, 1
        // Predicated region
        $region13: #{tpu_custom_call.1} parent=11 // pred_check
          %p144 = pneg %p61
        $region14: #{tpu_custom_call.1} parent=11 // pred_check_branch
          %146 = sbr.rel (%p144) target = $region16
        $region15: #{tpu_custom_call.1} parent=11 // pred_region
          %s148 = ssub.s32 3072, 3072
          %149 = vsyncadd [#allocation3], %s148
          %s150 = sshll.u32 [#allocation2], 4
          %s151 = int_to_ptr.vmem [resolvable:$true] %s150
          %156 = dma.hbm_to_vmem [thread:$0]  %s1, 3072, %s151, [#allocation3], 128, 128, 8
        $region16: #{tpu_custom_call.1} parent=11 // pred_fallthru
          _
        // Predicated region
        $region17: #{tpu_custom_call.1} parent=11 // pred_check
          %p157 = pneg %p82
        $region18: #{tpu_custom_call.1} parent=11 // pred_check_branch
          %159 = sbr.rel (%p157) target = $region20
        $region19: #{tpu_custom_call.1} parent=11 // pred_region
          _
        $region20: #{tpu_custom_call.1} parent=11 // pred_fallthru
          _
        // Predicated region
        $region21: #{tpu_custom_call.1} parent=11 // pred_check
          %p160 = pneg %p103
        $region22: #{tpu_custom_call.1} parent=11 // pred_check_branch
          %162 = sbr.rel (%p160) target = $region24
        $region23: #{tpu_custom_call.1} parent=11 // pred_region
          _
        $region24: #{tpu_custom_call.1} parent=11 // pred_fallthru
          _
      $region12: #{tpu_custom_call.1} parent=5 // pred_fallthru
        _
      %p163 = scmp.lt.s32.totalorder %s14, 2
      // Predicated region
      $region25: #{tpu_custom_call.1} parent=5 // pred_check
        %p164 = pneg %p163
      $region26: #{tpu_custom_call.1} parent=5 // pred_check_branch
        %166 = sbr.rel (%p164) target = $region28
      $region27: #{tpu_custom_call.1} parent=5 // pred_region
        // Predicated region
        $region29: #{tpu_custom_call.1} parent=27 // pred_check
          %p167 = pneg %p34
        $region30: #{tpu_custom_call.1} parent=27 // pred_check_branch
          %169 = sbr.rel (%p167) target = $region32
        $region31: #{tpu_custom_call.1} parent=27 // pred_region
          %p170 = scmp.lt.s32.totalorder %s14, 1
          %s171 = scalar_select %p170, %s14, 1
          %s172 = smul.addr %s171, 2
          %s173 = scalar_lea.vmem %s0, %s172
        $region32: #{tpu_custom_call.1} parent=27 // pred_fallthru
          _
      $region28: #{tpu_custom_call.1} parent=5 // pred_fallthru
        _
      %p174 = scmp.le.s32.totalorder 1, %s14
      %p175 = scmp.lt.s32.totalorder %s14, 3
      %p176 = pnand %p174, %p175
      %p177 = pneg %p176
      // Predicated region
      $region33: #{tpu_custom_call.1} parent=5 // pred_check
        _
      $region34: #{tpu_custom_call.1} parent=5 // pred_check_branch
        %179 = sbr.rel (%p176) target = $region36
      $region35: #{tpu_custom_call.1} parent=5 // pred_region
        %s180 = ssub.s32 %s14, 1
        // Predicated region
        $region37: #{tpu_custom_call.1} parent=35 // pred_check
          %p181 = pneg %p61
        $region38: #{tpu_custom_call.1} parent=35 // pred_check_branch
          %183 = sbr.rel (%p181) target = $region40
        $region39: #{tpu_custom_call.1} parent=35 // pred_region
          %184 = dma.done [#allocation3], 3072
        $region40: #{tpu_custom_call.1} parent=35 // pred_fallthru
          _
        %p185 = scmp.lt.s32.totalorder %s19, 1
        %s186 = scalar_select %p185, %s19, 1
        %s187 = smul.addr %s186, 2
        %s188 = scalar_lea.vmem %s0, %s187
        %p189 = pneg %p40
        %p190 = pneg %p37
        %p191 = pneg %p61
        %p192 = pneg %p58
        %p193 = pneg %p82
        %p194 = pneg %p79
        %p195 = pneg %p103
        %p196 = pneg %p100
        %p197 = pneg %p129
        %p198 = pneg %p126
        %s199 = sand.u32 %s116, 1
        %s200 = scalar_lea.sflag [#allocation4], %s199
        %s201 = sand.u32 %s116, 1
        %s202 = scalar_lea.vmem [#allocation5], %s201
        %p203 = scmp.lt.s32.totalorder %s19, 1
        %s204 = scalar_select %p203, %s19, 1
        %s205 = smul.addr %s204, 2
        %s206 = scalar_lea.vmem %s0, %s205
        %v207 = vld [vmem:[%s206] sm:$0x3]
        %v208 = vld [vmem:[%s2] sm:$0xff]
        %v209 = vld [vmem:[%s2 + $0x8] sm:$0xff]
        %v210 = vld [vmem:[%s2 + $0x10] sm:$0xff]
        %v211 = vld [vmem:[%s2 + $0x18] sm:$0xff]
        %v212 = vld [vmem:[%s2 + $0x20] sm:$0xff]
        %v213 = vld [vmem:[%s2 + $0x28] sm:$0xff]
        %v214 = vld [vmem:[%s2 + $0x30] sm:$0xff]
        %v215 = vld [vmem:[%s2 + $0x38] sm:$0xff]
        %217 = vset.pattern.permute.xlu0 0
        %218 = vperm.xlu0 %217, %v208
        %v219 = vpop.permute.xlu0 %218
        %222 = vset.pattern.permute.xlu0 0
        %223 = vperm.xlu0 %222, %v209
        %v224 = vpop.permute.xlu0 %223
        %227 = vset.pattern.permute.xlu0 0
        %228 = vperm.xlu0 %227, %v210
        %v229 = vpop.permute.xlu0 %228
        %232 = vset.pattern.permute.xlu0 0
        %233 = vperm.xlu0 %232, %v211
        %v234 = vpop.permute.xlu0 %233
        %237 = vset.pattern.permute.xlu0 0
        %238 = vperm.xlu0 %237, %v212
        %v239 = vpop.permute.xlu0 %238
        %242 = vset.pattern.permute.xlu0 0
        %243 = vperm.xlu0 %242, %v213
        %v244 = vpop.permute.xlu0 %243
        %247 = vset.pattern.permute.xlu0 0
        %248 = vperm.xlu0 %247, %v214
        %v249 = vpop.permute.xlu0 %248
        %252 = vset.pattern.permute.xlu0 0
        %253 = vperm.xlu0 %252, %v215
        %v254 = vpop.permute.xlu0 %253
        %v256 = vlaneseq
        %v257 = vshrl.u32 %v256, 7
        %v258 = vsub.s32 0, %v257
        %v259 = vrot.slane %v207, %v258
        %v260 = vmul.f32 %v219, %v259
        %v261 = vmul.f32 %v224, %v259
        %v262 = vmul.f32 %v229, %v259
        %v263 = vmul.f32 %v234, %v259
        %v264 = vmul.f32 %v239, %v259
        %v265 = vmul.f32 %v244, %v259
        %v266 = vmul.f32 %v249, %v259
        %v267 = vmul.f32 %v254, %v259
        %268 = vset.pattern.permute.xlu0 1
        %269 = vperm.xlu0 %268, %v208
        %v270 = vpop.permute.xlu0 %269
        %272 = vset.pattern.permute.xlu0 1
        %273 = vperm.xlu0 %272, %v209
        %v274 = vpop.permute.xlu0 %273
        %276 = vset.pattern.permute.xlu0 1
        %277 = vperm.xlu0 %276, %v210
        %v278 = vpop.permute.xlu0 %277
        %280 = vset.pattern.permute.xlu0 1
        %281 = vperm.xlu0 %280, %v211
        %v282 = vpop.permute.xlu0 %281
        %284 = vset.pattern.permute.xlu0 1
        %285 = vperm.xlu0 %284, %v212
        %v286 = vpop.permute.xlu0 %285
        %288 = vset.pattern.permute.xlu0 1
        %289 = vperm.xlu0 %288, %v213
        %v290 = vpop.permute.xlu0 %289
        %292 = vset.pattern.permute.xlu0 1
        %293 = vperm.xlu0 %292, %v214
        %v294 = vpop.permute.xlu0 %293
        %296 = vset.pattern.permute.xlu0 1
        %297 = vperm.xlu0 %296, %v215
        %v298 = vpop.permute.xlu0 %297
        %v300 = vlaneseq
        %v301 = vshrl.u32 %v300, 7
        %v302 = vsub.s32 1, %v301
        %v303 = vrot.slane %v207, %v302
        %v304 = vmul.f32 %v270, %v303
        %v305 = vmul.f32 %v274, %v303
        %v306 = vmul.f32 %v278, %v303
        %v307 = vmul.f32 %v282, %v303
        %v308 = vmul.f32 %v286, %v303
        %v309 = vmul.f32 %v290, %v303
        %v310 = vmul.f32 %v294, %v303
        %v311 = vmul.f32 %v298, %v303
        %v312 = vadd.f32 %v260, %v304
        %v313 = vadd.f32 %v261, %v305
        %v314 = vadd.f32 %v262, %v306
        %v315 = vadd.f32 %v263, %v307
        %v316 = vadd.f32 %v264, %v308
        %v317 = vadd.f32 %v265, %v309
        %v318 = vadd.f32 %v266, %v310
        %v319 = vadd.f32 %v267, %v311
        %320 = vset.pattern.permute.xlu0 4
        %321 = vperm.xlu0 %320, %v208
        %v322 = vpop.permute.xlu0 %321
        %324 = vset.pattern.permute.xlu0 4
        %325 = vperm.xlu0 %324, %v209
        %v326 = vpop.permute.xlu0 %325
        %328 = vset.pattern.permute.xlu0 4
        %329 = vperm.xlu0 %328, %v210
        %v330 = vpop.permute.xlu0 %329
        %332 = vset.pattern.permute.xlu0 4
        %333 = vperm.xlu0 %332, %v211
        %v334 = vpop.permute.xlu0 %333
        %336 = vset.pattern.permute.xlu0 4
        %337 = vperm.xlu0 %336, %v212
        %v338 = vpop.permute.xlu0 %337
        %340 = vset.pattern.permute.xlu0 4
        %341 = vperm.xlu0 %340, %v213
        %v342 = vpop.permute.xlu0 %341
        %344 = vset.pattern.permute.xlu0 4
        %345 = vperm.xlu0 %344, %v214
        %v346 = vpop.permute.xlu0 %345
        %348 = vset.pattern.permute.xlu0 4
        %349 = vperm.xlu0 %348, %v215
        %v350 = vpop.permute.xlu0 %349
        %v352 = vadd.f32 %v312, %v322
        %v353 = vadd.f32 %v313, %v326
        %v354 = vadd.f32 %v314, %v330
        %v355 = vadd.f32 %v315, %v334
        %v356 = vadd.f32 %v316, %v338
        %v357 = vadd.f32 %v317, %v342
        %v358 = vadd.f32 %v318, %v346
        %v359 = vadd.f32 %v319, %v350
        %v360 = vtanh.pop %v352
        %v361 = vtanh.pop %v353
        %v362 = vtanh.pop %v354
        %v363 = vtanh.pop %v355
        %v364 = vtanh.pop %v356
        %v365 = vtanh.pop %v357
        %v366 = vtanh.pop %v358
        %v367 = vtanh.pop %v359
        %v368 = vld [vmem:[#allocation2] sm:$0xff]
        %v369 = vld [vmem:[#allocation2 + $0x8] sm:$0xff]
        %v370 = vld [vmem:[#allocation2 + $0x10] sm:$0xff]
        %v371 = vld [vmem:[#allocation2 + $0x18] sm:$0xff]
        %v372 = vld [vmem:[#allocation2 + $0x20] sm:$0xff]
        %v373 = vld [vmem:[#allocation2 + $0x28] sm:$0xff]
        %v374 = vld [vmem:[#allocation2 + $0x30] sm:$0xff]
        %v375 = vld [vmem:[#allocation2 + $0x38] sm:$0xff]
        %376 = vset.pattern.permute.xlu0 5
        %377 = vperm.xlu0 %376, %v208
        %v378 = vpop.permute.xlu0 %377
        %380 = vset.pattern.permute.xlu0 5
        %381 = vperm.xlu0 %380, %v209
        %v382 = vpop.permute.xlu0 %381
        %384 = vset.pattern.permute.xlu0 5
        %385 = vperm.xlu0 %384, %v210
        %v386 = vpop.permute.xlu0 %385
        %388 = vset.pattern.permute.xlu0 5
        %389 = vperm.xlu0 %388, %v211
        %v390 = vpop.permute.xlu0 %389
        %392 = vset.pattern.permute.xlu0 5
        %393 = vperm.xlu0 %392, %v212
        %v394 = vpop.permute.xlu0 %393
        %396 = vset.pattern.permute.xlu0 5
        %397 = vperm.xlu0 %396, %v213
        %v398 = vpop.permute.xlu0 %397
        %400 = vset.pattern.permute.xlu0 5
        %401 = vperm.xlu0 %400, %v214
        %v402 = vpop.permute.xlu0 %401
        %404 = vset.pattern.permute.xlu0 5
        %405 = vperm.xlu0 %404, %v215
        %v406 = vpop.permute.xlu0 %405
        %vm408 = vcmask 523264
        %v410 = vsel %vm408, %v368, 0
        %v413 = vsel %vm408, %v369, 0
        %v416 = vsel %vm408, %v370, 0
        %v419 = vsel %vm408, %v371, 0
        %v422 = vsel %vm408, %v372, 0
        %v425 = vsel %vm408, %v373, 0
        %v428 = vsel %vm408, %v374, 0
        %v431 = vsel %vm408, %v375, 0
        %433 = vmatprep.subr.mxu0 0.0
        %434 = vmatpush1.msra.mxu0 %v360
        %435 = vmatprep.subr.mxu0 0.0
        %436 = vmatpush1.msra.mxu0 %v361
        %437 = vmatprep.subr.mxu0 0.0
        %438 = vmatpush1.msra.mxu0 %v362
        %439 = vmatprep.subr.mxu0 0.0
        %440 = vmatpush1.msra.mxu0 %v363
        %441 = vmatprep.subr.mxu0 0.0
        %442 = vmatpush1.msra.mxu0 %v364
        %443 = vmatprep.subr.mxu0 0.0
        %444 = vmatpush1.msra.mxu0 %v365
        %445 = vmatprep.subr.mxu0 0.0
        %446 = vmatpush1.msra.mxu0 %v366
        %447 = vmatprep.subr.mxu0 0.0
        %448 = vmatpush1.msra.mxu0 %v367
        %449 = vmatprep.subr.mxu0 0.0
        %450 = vmatpush1.msra.mxu0 0.0
        %451 = vmatprep.subr.mxu0 0.0
        %452 = vmatpush1.msra.mxu0 0.0
        %453 = vmatprep.subr.mxu0 0.0
        %454 = vmatpush1.msra.mxu0 0.0
        %455 = vmatprep.subr.mxu0 0.0
        %456 = vmatpush1.msra.mxu0 0.0
        %457 = vmatprep.subr.mxu0 0.0
        %458 = vmatpush1.msra.mxu0 0.0
        %459 = vmatprep.subr.mxu0 0.0
        %460 = vmatpush1.msra.mxu0 0.0
        %461 = vmatprep.subr.mxu0 0.0
        %462 = vmatpush1.msra.mxu0 0.0
        %463 = vmatprep.subr.mxu0 0.0
        %464 = vmatpush1.msra.mxu0 0.0
        %465 = vmatprep.subr.mxu0 0.0
        %466 = vmatpush1.msra.mxu0 0.0
        %467 = vmatprep.subr.mxu0 0.0
        %468 = vmatpush1.msra.mxu0 0.0
        %469 = vmatprep.subr.mxu0 0.0
        %470 = vmatpush1.msra.mxu0 0.0
        %471 = vmatprep.subr.mxu0 0.0
        %472 = vmatpush1.msra.mxu0 0.0
        %473 = vmatprep.subr.mxu0 0.0
        %474 = vmatpush1.msra.mxu0 0.0
        %475 = vmatprep.subr.mxu0 0.0
        %476 = vmatpush1.msra.mxu0 0.0
        %477 = vmatprep.subr.mxu0 0.0
        %478 = vmatpush1.msra.mxu0 0.0
        %479 = vmatprep.subr.mxu0 0.0
        %480 = vmatpush1.msra.mxu0 0.0
        %481 = vmatprep.subr.mxu0 0.0
        %482 = vmatpush1.msra.mxu0 0.0
        %483 = vmatprep.subr.mxu0 0.0
        %484 = vmatpush1.msra.mxu0 0.0
        %485 = vmatprep.subr.mxu0 0.0
        %486 = vmatpush1.msra.mxu0 0.0
        %487 = vmatprep.subr.mxu0 0.0
        %488 = vmatpush1.msra.mxu0 0.0
        %489 = vmatprep.subr.mxu0 0.0
        %490 = vmatpush1.msra.mxu0 0.0
        %491 = vmatprep.subr.mxu0 0.0
        %492 = vmatpush1.msra.mxu0 0.0
        %493 = vmatprep.subr.mxu0 0.0
        %494 = vmatpush1.msra.mxu0 0.0
        %495 = vmatprep.subr.mxu0 0.0
        %496 = vmatpush1.msra.mxu0 0.0
        %497 = vmatprep.mubr.f32.mxu0 0.0
        %498 = vmatmul.mubr.f32.gmra.mrb[0].mxu0 %v410
        %v499 = vpop.f32.mrb[0].mxu0
        %v500 = vadd.f32 %v378, %v499
        %v501 = vpop.f32.mrb[0].mxu0
        %502 = vmatprep.mubr.f32.mxu0 0.0
        %503 = vmatmul.mubr.f32.gmra.mrb[0].mxu0 %v413
        %v504 = vpop.f32.mrb[0].mxu0
        %v505 = vadd.f32 %v382, %v504
        %v506 = vpop.f32.mrb[0].mxu0
        %507 = vmatprep.mubr.f32.mxu0 0.0
        %508 = vmatmul.mubr.f32.gmra.mrb[0].mxu0 %v416
        %v509 = vpop.f32.mrb[0].mxu0
        %v510 = vadd.f32 %v386, %v509
        %v511 = vpop.f32.mrb[0].mxu0
        %512 = vmatprep.mubr.f32.mxu0 0.0
        %513 = vmatmul.mubr.f32.gmra.mrb[0].mxu0 %v419
        %v514 = vpop.f32.mrb[0].mxu0
        %v515 = vadd.f32 %v390, %v514
        %v516 = vpop.f32.mrb[0].mxu0
        %517 = vmatprep.mubr.f32.mxu0 0.0
        %518 = vmatmul.mubr.f32.gmra.mrb[0].mxu0 %v422
        %v519 = vpop.f32.mrb[0].mxu0
        %v520 = vadd.f32 %v394, %v519
        %v521 = vpop.f32.mrb[0].mxu0
        %522 = vmatprep.mubr.f32.mxu0 0.0
        %523 = vmatmul.mubr.f32.gmra.mrb[0].mxu0 %v425
        %v524 = vpop.f32.mrb[0].mxu0
        %v525 = vadd.f32 %v398, %v524
        %v526 = vpop.f32.mrb[0].mxu0
        %527 = vmatprep.mubr.f32.mxu0 0.0
        %528 = vmatmul.mubr.f32.gmra.mrb[0].mxu0 %v428
        %v529 = vpop.f32.mrb[0].mxu0
        %v530 = vadd.f32 %v402, %v529
        %v531 = vpop.f32.mrb[0].mxu0
        %532 = vmatprep.mubr.f32.mxu0 0.0
        %533 = vmatmul.mubr.f32.gmra.mrb[0].mxu0 %v431
        %v534 = vpop.f32.mrb[0].mxu0
        %v535 = vadd.f32 %v406, %v534
        %v536 = vpop.f32.mrb[0].mxu0
        %537 = vdwg.mxu0
        %v538 = vtanh.pop %v500
        %v539 = vtanh.pop %v505
        %v540 = vtanh.pop %v510
        %v541 = vtanh.pop %v515
        %v542 = vtanh.pop %v520
        %v543 = vtanh.pop %v525
        %v544 = vtanh.pop %v530
        %v545 = vtanh.pop %v535
        %s546 = scalar_lea.vmem [#allocation2], 64
        %v547 = vld [vmem:[%s546] sm:$0xff]
        %v548 = vld [vmem:[%s546 + $0x8] sm:$0xff]
        %v549 = vld [vmem:[%s546 + $0x10] sm:$0xff]
        %v550 = vld [vmem:[%s546 + $0x18] sm:$0xff]
        %v551 = vld [vmem:[%s546 + $0x20] sm:$0xff]
        %v552 = vld [vmem:[%s546 + $0x28] sm:$0xff]
        %v553 = vld [vmem:[%s546 + $0x30] sm:$0xff]
        %v554 = vld [vmem:[%s546 + $0x38] sm:$0xff]
        %555 = vset.pattern.permute.xlu0 6
        %556 = vperm.xlu0 %555, %v208
        %v557 = vpop.permute.xlu0 %556
        %559 = vset.pattern.permute.xlu0 6
        %560 = vperm.xlu0 %559, %v209
        %v561 = vpop.permute.xlu0 %560
        %563 = vset.pattern.permute.xlu0 6
        %564 = vperm.xlu0 %563, %v210
        %v565 = vpop.permute.xlu0 %564
        %567 = vset.pattern.permute.xlu0 6
        %568 = vperm.xlu0 %567, %v211
        %v569 = vpop.permute.xlu0 %568
        %571 = vset.pattern.permute.xlu0 6
        %572 = vperm.xlu0 %571, %v212
        %v573 = vpop.permute.xlu0 %572
        %575 = vset.pattern.permute.xlu0 6
        %576 = vperm.xlu0 %575, %v213
        %v577 = vpop.permute.xlu0 %576
        %579 = vset.pattern.permute.xlu0 6
        %580 = vperm.xlu0 %579, %v214
        %v581 = vpop.permute.xlu0 %580
        %583 = vset.pattern.permute.xlu0 6
        %584 = vperm.xlu0 %583, %v215
        %v585 = vpop.permute.xlu0 %584
        %v588 = vsel %vm408, %v547, 0
        %v591 = vsel %vm408, %v548, 0
        %v594 = vsel %vm408, %v549, 0
        %v597 = vsel %vm408, %v550, 0
        %v600 = vsel %vm408, %v551, 0
        %v603 = vsel %vm408, %v552, 0
        %v606 = vsel %vm408, %v553, 0
        %v609 = vsel %vm408, %v554, 0
        %611 = vmatprep.subr.mxu0 0.0
        %612 = vmatpush1.msra.mxu0 %v538
        %613 = vmatprep.subr.mxu0 0.0
        %614 = vmatpush1.msra.mxu0 %v539
        %615 = vmatprep.subr.mxu0 0.0
        %616 = vmatpush1.msra.mxu0 %v540
        %617 = vmatprep.subr.mxu0 0.0
        %618 = vmatpush1.msra.mxu0 %v541
        %619 = vmatprep.subr.mxu0 0.0
        %620 = vmatpush1.msra.mxu0 %v542
        %621 = vmatprep.subr.mxu0 0.0
        %622 = vmatpush1.msra.mxu0 %v543
        %623 = vmatprep.subr.mxu0 0.0
        %624 = vmatpush1.msra.mxu0 %v544
        %625 = vmatprep.subr.mxu0 0.0
        %626 = vmatpush1.msra.mxu0 %v545
        %627 = vmatprep.subr.mxu0 0.0
        %628 = vmatpush1.msra.mxu0 0.0
        %629 = vmatprep.subr.mxu0 0.0
        %630 = vmatpush1.msra.mxu0 0.0
        %631 = vmatprep.subr.mxu0 0.0
        %632 = vmatpush1.msra.mxu0 0.0
        %633 = vmatprep.subr.mxu0 0.0
        %634 = vmatpush1.msra.mxu0 0.0
        %635 = vmatprep.subr.mxu0 0.0
        %636 = vmatpush1.msra.mxu0 0.0
        %637 = vmatprep.subr.mxu0 0.0
        %638 = vmatpush1.msra.mxu0 0.0
        %639 = vmatprep.subr.mxu0 0.0
        %640 = vmatpush1.msra.mxu0 0.0
        %641 = vmatprep.subr.mxu0 0.0
        %642 = vmatpush1.msra.mxu0 0.0
        %643 = vmatprep.subr.mxu0 0.0
        %644 = vmatpush1.msra.mxu0 0.0
        %645 = vmatprep.subr.mxu0 0.0
        %646 = vmatpush1.msra.mxu0 0.0
        %647 = vmatprep.subr.mxu0 0.0
        %648 = vmatpush1.msra.mxu0 0.0
        %649 = vmatprep.subr.mxu0 0.0
        %650 = vmatpush1.msra.mxu0 0.0
        %651 = vmatprep.subr.mxu0 0.0
        %652 = vmatpush1.msra.mxu0 0.0
        %653 = vmatprep.subr.mxu0 0.0
        %654 = vmatpush1.msra.mxu0 0.0
        %655 = vmatprep.subr.mxu0 0.0
        %656 = vmatpush1.msra.mxu0 0.0
        %657 = vmatprep.subr.mxu0 0.0
        %658 = vmatpush1.msra.mxu0 0.0
        %659 = vmatprep.subr.mxu0 0.0
        %660 = vmatpush1.msra.mxu0 0.0
        %661 = vmatprep.subr.mxu0 0.0
        %662 = vmatpush1.msra.mxu0 0.0
        %663 = vmatprep.subr.mxu0 0.0
        %664 = vmatpush1.msra.mxu0 0.0
        %665 = vmatprep.subr.mxu0 0.0
        %666 = vmatpush1.msra.mxu0 0.0
        %667 = vmatprep.subr.mxu0 0.0
        %668 = vmatpush1.msra.mxu0 0.0
        %669 = vmatprep.subr.mxu0 0.0
        %670 = vmatpush1.msra.mxu0 0.0
        %671 = vmatprep.subr.mxu0 0.0
        %672 = vmatpush1.msra.mxu0 0.0
        %673 = vmatprep.subr.mxu0 0.0
        %674 = vmatpush1.msra.mxu0 0.0
        %675 = vmatprep.mubr.f32.mxu0 0.0
        %676 = vmatmul.mubr.f32.gmra.mrb[0].mxu0 %v588
        %v677 = vpop.f32.mrb[0].mxu0
        %v678 = vadd.f32 %v557, %v677
        %v679 = vpop.f32.mrb[0].mxu0
        %680 = vmatprep.mubr.f32.mxu0 0.0
        %681 = vmatmul.mubr.f32.gmra.mrb[0].mxu0 %v591
        %v682 = vpop.f32.mrb[0].mxu0
        %v683 = vadd.f32 %v561, %v682
        %v684 = vpop.f32.mrb[0].mxu0
        %685 = vmatprep.mubr.f32.mxu0 0.0
        %686 = vmatmul.mubr.f32.gmra.mrb[0].mxu0 %v594
        %v687 = vpop.f32.mrb[0].mxu0
        %v688 = vadd.f32 %v565, %v687
        %v689 = vpop.f32.mrb[0].mxu0
        %690 = vmatprep.mubr.f32.mxu0 0.0
        %691 = vmatmul.mubr.f32.gmra.mrb[0].mxu0 %v597
        %v692 = vpop.f32.mrb[0].mxu0
        %v693 = vadd.f32 %v569, %v692
        %v694 = vpop.f32.mrb[0].mxu0
        %695 = vmatprep.mubr.f32.mxu0 0.0
        %696 = vmatmul.mubr.f32.gmra.mrb[0].mxu0 %v600
        %v697 = vpop.f32.mrb[0].mxu0
        %v698 = vadd.f32 %v573, %v697
        %v699 = vpop.f32.mrb[0].mxu0
        %700 = vmatprep.mubr.f32.mxu0 0.0
        %701 = vmatmul.mubr.f32.gmra.mrb[0].mxu0 %v603
        %v702 = vpop.f32.mrb[0].mxu0
        %v703 = vadd.f32 %v577, %v702
        %v704 = vpop.f32.mrb[0].mxu0
        %705 = vmatprep.mubr.f32.mxu0 0.0
        %706 = vmatmul.mubr.f32.gmra.mrb[0].mxu0 %v606
        %v707 = vpop.f32.mrb[0].mxu0
        %v708 = vadd.f32 %v581, %v707
        %v709 = vpop.f32.mrb[0].mxu0
        %710 = vmatprep.mubr.f32.mxu0 0.0
        %711 = vmatmul.mubr.f32.gmra.mrb[0].mxu0 %v609
        %v712 = vpop.f32.mrb[0].mxu0
        %v713 = vadd.f32 %v585, %v712
        %v714 = vpop.f32.mrb[0].mxu0
        %715 = vdwg.mxu0
        %v716 = vtanh.pop %v678
        %v717 = vtanh.pop %v683
        %v718 = vtanh.pop %v688
        %v719 = vtanh.pop %v693
        %v720 = vtanh.pop %v698
        %v721 = vtanh.pop %v703
        %v722 = vtanh.pop %v708
        %v723 = vtanh.pop %v713
        %s724 = scalar_lea.vmem [#allocation2], 128
        %v725 = vld [vmem:[%s724] sm:$0xff]
        %v726 = vld [vmem:[%s724 + $0x8] sm:$0xff]
        %v727 = vld [vmem:[%s724 + $0x10] sm:$0xff]
        %v728 = vld [vmem:[%s724 + $0x18] sm:$0xff]
        %v729 = vld [vmem:[%s724 + $0x20] sm:$0xff]
        %v730 = vld [vmem:[%s724 + $0x28] sm:$0xff]
        %v731 = vld [vmem:[%s724 + $0x30] sm:$0xff]
        %v732 = vld [vmem:[%s724 + $0x38] sm:$0xff]
        %733 = vset.pattern.permute.xlu0 2
        %734 = vperm.xlu0 %733, %v208
        %v735 = vpop.permute.xlu0 %734
        %737 = vset.pattern.permute.xlu0 2
        %738 = vperm.xlu0 %737, %v209
        %v739 = vpop.permute.xlu0 %738
        %741 = vset.pattern.permute.xlu0 2
        %742 = vperm.xlu0 %741, %v210
        %v743 = vpop.permute.xlu0 %742
        %745 = vset.pattern.permute.xlu0 2
        %746 = vperm.xlu0 %745, %v211
        %v747 = vpop.permute.xlu0 %746
        %749 = vset.pattern.permute.xlu0 2
        %750 = vperm.xlu0 %749, %v212
        %v751 = vpop.permute.xlu0 %750
        %753 = vset.pattern.permute.xlu0 2
        %754 = vperm.xlu0 %753, %v213
        %v755 = vpop.permute.xlu0 %754
        %757 = vset.pattern.permute.xlu0 2
        %758 = vperm.xlu0 %757, %v214
        %v759 = vpop.permute.xlu0 %758
        %761 = vset.pattern.permute.xlu0 2
        %762 = vperm.xlu0 %761, %v215
        %v763 = vpop.permute.xlu0 %762
        %v765 = vmul.f32 %v735, %v259
        %v766 = vmul.f32 %v739, %v259
        %v767 = vmul.f32 %v743, %v259
        %v768 = vmul.f32 %v747, %v259
        %v769 = vmul.f32 %v751, %v259
        %v770 = vmul.f32 %v755, %v259
        %v771 = vmul.f32 %v759, %v259
        %v772 = vmul.f32 %v763, %v259
        %773 = vset.pattern.permute.xlu0 3
        %774 = vperm.xlu0 %773, %v208
        %v775 = vpop.permute.xlu0 %774
        %777 = vset.pattern.permute.xlu0 3
        %778 = vperm.xlu0 %777, %v209
        %v779 = vpop.permute.xlu0 %778
        %781 = vset.pattern.permute.xlu0 3
        %782 = vperm.xlu0 %781, %v210
        %v783 = vpop.permute.xlu0 %782
        %785 = vset.pattern.permute.xlu0 3
        %786 = vperm.xlu0 %785, %v211
        %v787 = vpop.permute.xlu0 %786
        %789 = vset.pattern.permute.xlu0 3
        %790 = vperm.xlu0 %789, %v212
        %v791 = vpop.permute.xlu0 %790
        %793 = vset.pattern.permute.xlu0 3
        %794 = vperm.xlu0 %793, %v213
        %v795 = vpop.permute.xlu0 %794
        %797 = vset.pattern.permute.xlu0 3
        %798 = vperm.xlu0 %797, %v214
        %v799 = vpop.permute.xlu0 %798
        %801 = vset.pattern.permute.xlu0 3
        %802 = vperm.xlu0 %801, %v215
        %v803 = vpop.permute.xlu0 %802
        %v805 = vmul.f32 %v775, %v303
        %v806 = vmul.f32 %v779, %v303
        %v807 = vmul.f32 %v783, %v303
        %v808 = vmul.f32 %v787, %v303
        %v809 = vmul.f32 %v791, %v303
        %v810 = vmul.f32 %v795, %v303
        %v811 = vmul.f32 %v799, %v303
        %v812 = vmul.f32 %v803, %v303
        %v813 = vadd.f32 %v765, %v805
        %v814 = vadd.f32 %v766, %v806
        %v815 = vadd.f32 %v767, %v807
        %v816 = vadd.f32 %v768, %v808
        %v817 = vadd.f32 %v769, %v809
        %v818 = vadd.f32 %v770, %v810
        %v819 = vadd.f32 %v771, %v811
        %v820 = vadd.f32 %v772, %v812
        %v822 = vsel %vm408, %v725, 0
        %v825 = vsel %vm408, %v726, 0
        %v828 = vsel %vm408, %v727, 0
        %v831 = vsel %vm408, %v728, 0
        %v834 = vsel %vm408, %v729, 0
        %v837 = vsel %vm408, %v730, 0
        %v840 = vsel %vm408, %v731, 0
        %v843 = vsel %vm408, %v732, 0
        %845 = vmatprep.subr.mxu0 0.0
        %846 = vmatpush1.msra.mxu0 %v716
        %847 = vmatprep.subr.mxu0 0.0
        %848 = vmatpush1.msra.mxu0 %v717
        %849 = vmatprep.subr.mxu0 0.0
        %850 = vmatpush1.msra.mxu0 %v718
        %851 = vmatprep.subr.mxu0 0.0
        %852 = vmatpush1.msra.mxu0 %v719
        %853 = vmatprep.subr.mxu0 0.0
        %854 = vmatpush1.msra.mxu0 %v720
        %855 = vmatprep.subr.mxu0 0.0
        %856 = vmatpush1.msra.mxu0 %v721
        %857 = vmatprep.subr.mxu0 0.0
        %858 = vmatpush1.msra.mxu0 %v722
        %859 = vmatprep.subr.mxu0 0.0
        %860 = vmatpush1.msra.mxu0 %v723
        %861 = vmatprep.subr.mxu0 0.0
        %862 = vmatpush1.msra.mxu0 0.0
        %863 = vmatprep.subr.mxu0 0.0
        %864 = vmatpush1.msra.mxu0 0.0
        %865 = vmatprep.subr.mxu0 0.0
        %866 = vmatpush1.msra.mxu0 0.0
        %867 = vmatprep.subr.mxu0 0.0
        %868 = vmatpush1.msra.mxu0 0.0
        %869 = vmatprep.subr.mxu0 0.0
        %870 = vmatpush1.msra.mxu0 0.0
        %871 = vmatprep.subr.mxu0 0.0
        %872 = vmatpush1.msra.mxu0 0.0
        %873 = vmatprep.subr.mxu0 0.0
        %874 = vmatpush1.msra.mxu0 0.0
        %875 = vmatprep.subr.mxu0 0.0
        %876 = vmatpush1.msra.mxu0 0.0
        %877 = vmatprep.subr.mxu0 0.0
        %878 = vmatpush1.msra.mxu0 0.0
        %879 = vmatprep.subr.mxu0 0.0
        %880 = vmatpush1.msra.mxu0 0.0
        %881 = vmatprep.subr.mxu0 0.0
        %882 = vmatpush1.msra.mxu0 0.0
        %883 = vmatprep.subr.mxu0 0.0
        %884 = vmatpush1.msra.mxu0 0.0
        %885 = vmatprep.subr.mxu0 0.0
        %886 = vmatpush1.msra.mxu0 0.0
        %887 = vmatprep.subr.mxu0 0.0
        %888 = vmatpush1.msra.mxu0 0.0
        %889 = vmatprep.subr.mxu0 0.0
        %890 = vmatpush1.msra.mxu0 0.0
        %891 = vmatprep.subr.mxu0 0.0
        %892 = vmatpush1.msra.mxu0 0.0
        %893 = vmatprep.subr.mxu0 0.0
        %894 = vmatpush1.msra.mxu0 0.0
        %895 = vmatprep.subr.mxu0 0.0
        %896 = vmatpush1.msra.mxu0 0.0
        %897 = vmatprep.subr.mxu0 0.0
        %898 = vmatpush1.msra.mxu0 0.0
        %899 = vmatprep.subr.mxu0 0.0
        %900 = vmatpush1.msra.mxu0 0.0
        %901 = vmatprep.subr.mxu0 0.0
        %902 = vmatpush1.msra.mxu0 0.0
        %903 = vmatprep.subr.mxu0 0.0
        %904 = vmatpush1.msra.mxu0 0.0
        %905 = vmatprep.subr.mxu0 0.0
        %906 = vmatpush1.msra.mxu0 0.0
        %907 = vmatprep.subr.mxu0 0.0
        %908 = vmatpush1.msra.mxu0 0.0
        %909 = vmatprep.mubr.f32.mxu0 0.0
        %910 = vmatmul.mubr.f32.gmra.mrb[0].mxu0 %v822
        %v911 = vpop.f32.mrb[0].mxu0
        %v912 = vadd.f32 %v813, %v911
        %v913 = vpop.f32.mrb[0].mxu0
        %914 = vmatprep.mubr.f32.mxu0 0.0
        %915 = vmatmul.mubr.f32.gmra.mrb[0].mxu0 %v825
        %v916 = vpop.f32.mrb[0].mxu0
        %v917 = vadd.f32 %v814, %v916
        %v918 = vpop.f32.mrb[0].mxu0
        %919 = vmatprep.mubr.f32.mxu0 0.0
        %920 = vmatmul.mubr.f32.gmra.mrb[0].mxu0 %v828
        %v921 = vpop.f32.mrb[0].mxu0
        %v922 = vadd.f32 %v815, %v921
        %v923 = vpop.f32.mrb[0].mxu0
        %924 = vmatprep.mubr.f32.mxu0 0.0
        %925 = vmatmul.mubr.f32.gmra.mrb[0].mxu0 %v831
        %v926 = vpop.f32.mrb[0].mxu0
        %v927 = vadd.f32 %v816, %v926
        %v928 = vpop.f32.mrb[0].mxu0
        %929 = vmatprep.mubr.f32.mxu0 0.0
        %930 = vmatmul.mubr.f32.gmra.mrb[0].mxu0 %v834
        %v931 = vpop.f32.mrb[0].mxu0
        %v932 = vadd.f32 %v817, %v931
        %v933 = vpop.f32.mrb[0].mxu0
        %934 = vmatprep.mubr.f32.mxu0 0.0
        %935 = vmatmul.mubr.f32.gmra.mrb[0].mxu0 %v837
        %v936 = vpop.f32.mrb[0].mxu0
        %v937 = vadd.f32 %v818, %v936
        %v938 = vpop.f32.mrb[0].mxu0
        %939 = vmatprep.mubr.f32.mxu0 0.0
        %940 = vmatmul.mubr.f32.gmra.mrb[0].mxu0 %v840
        %v941 = vpop.f32.mrb[0].mxu0
        %v942 = vadd.f32 %v819, %v941
        %v943 = vpop.f32.mrb[0].mxu0
        %944 = vmatprep.mubr.f32.mxu0 0.0
        %945 = vmatmul.mubr.f32.gmra.mrb[0].mxu0 %v843
        %v946 = vpop.f32.mrb[0].mxu0
        %v947 = vadd.f32 %v820, %v946
        %v948 = vpop.f32.mrb[0].mxu0
        %949 = vdwg.mxu0
        %v950 = vmul.f32 %v912, 0.70710677
        %v951 = vmul.f32 %v917, 0.70710677
        %v952 = vmul.f32 %v922, 0.70710677
        %v953 = vmul.f32 %v927, 0.70710677
        %v954 = vmul.f32 %v932, 0.70710677
        %v955 = vmul.f32 %v937, 0.70710677
        %v956 = vmul.f32 %v942, 0.70710677
        %v957 = vmul.f32 %v947, 0.70710677
        %958 = vset.pattern.permute.xlu0 7
        %959 = vperm.xlu0 %958, %v208
        %v960 = vpop.permute.xlu0 %959
        %962 = vset.pattern.permute.xlu0 7
        %963 = vperm.xlu0 %962, %v209
        %v964 = vpop.permute.xlu0 %963
        %966 = vset.pattern.permute.xlu0 7
        %967 = vperm.xlu0 %966, %v210
        %v968 = vpop.permute.xlu0 %967
        %970 = vset.pattern.permute.xlu0 7
        %971 = vperm.xlu0 %970, %v211
        %v972 = vpop.permute.xlu0 %971
        %974 = vset.pattern.permute.xlu0 7
        %975 = vperm.xlu0 %974, %v212
        %v976 = vpop.permute.xlu0 %975
        %978 = vset.pattern.permute.xlu0 7
        %979 = vperm.xlu0 %978, %v213
        %v980 = vpop.permute.xlu0 %979
        %982 = vset.pattern.permute.xlu0 7
        %983 = vperm.xlu0 %982, %v214
        %v984 = vpop.permute.xlu0 %983
        %986 = vset.pattern.permute.xlu0 7
        %987 = vperm.xlu0 %986, %v215
        %v988 = vpop.permute.xlu0 %987
        %v990 = vadd.f32 %v950, %v960
        %v991 = vadd.f32 %v951, %v964
        %v992 = vadd.f32 %v952, %v968
        %v993 = vadd.f32 %v953, %v972
        %v994 = vadd.f32 %v954, %v976
        %v995 = vadd.f32 %v955, %v980
        %v996 = vadd.f32 %v956, %v984
        %v997 = vadd.f32 %v957, %v988
        %v998 = vtanh.pop %v990
        %v999 = vtanh.pop %v991
        %v1000 = vtanh.pop %v992
        %v1001 = vtanh.pop %v993
        %v1002 = vtanh.pop %v994
        %v1003 = vtanh.pop %v995
        %v1004 = vtanh.pop %v996
        %v1005 = vtanh.pop %v997
        %v1006 = vld [vmem:[%s3] sm:$0xff]
        %1008 = vset.pattern.permute.xlu0 64
        %1009 = vperm.xlu0 %1008, %v1006
        %v1010 = vpop.permute.xlu0 %1009
        %v1012 = vsel %vm408, %v1006, 0
        %1014 = vmatprep.subr.mxu0 0.0
        %1015 = vmatpush1.msra.mxu0 %v998
        %1016 = vmatprep.subr.mxu0 0.0
        %1017 = vmatpush1.msra.mxu0 %v999
        %1018 = vmatprep.subr.mxu0 0.0
        %1019 = vmatpush1.msra.mxu0 %v1000
        %1020 = vmatprep.subr.mxu0 0.0
        %1021 = vmatpush1.msra.mxu0 %v1001
        %1022 = vmatprep.subr.mxu0 0.0
        %1023 = vmatpush1.msra.mxu0 %v1002
        %1024 = vmatprep.subr.mxu0 0.0
        %1025 = vmatpush1.msra.mxu0 %v1003
        %1026 = vmatprep.subr.mxu0 0.0
        %1027 = vmatpush1.msra.mxu0 %v1004
        %1028 = vmatprep.subr.mxu0 0.0
        %1029 = vmatpush1.msra.mxu0 %v1005
        %1030 = vmatprep.subr.mxu0 0.0
        %1031 = vmatpush1.msra.mxu0 0.0
        %1032 = vmatprep.subr.mxu0 0.0
        %1033 = vmatpush1.msra.mxu0 0.0
        %1034 = vmatprep.subr.mxu0 0.0
        %1035 = vmatpush1.msra.mxu0 0.0
        %1036 = vmatprep.subr.mxu0 0.0
        %1037 = vmatpush1.msra.mxu0 0.0
        %1038 = vmatprep.subr.mxu0 0.0
        %1039 = vmatpush1.msra.mxu0 0.0
        %1040 = vmatprep.subr.mxu0 0.0
        %1041 = vmatpush1.msra.mxu0 0.0
        %1042 = vmatprep.subr.mxu0 0.0
        %1043 = vmatpush1.msra.mxu0 0.0
        %1044 = vmatprep.subr.mxu0 0.0
        %1045 = vmatpush1.msra.mxu0 0.0
        %1046 = vmatprep.subr.mxu0 0.0
        %1047 = vmatpush1.msra.mxu0 0.0
        %1048 = vmatprep.subr.mxu0 0.0
        %1049 = vmatpush1.msra.mxu0 0.0
        %1050 = vmatprep.subr.mxu0 0.0
        %1051 = vmatpush1.msra.mxu0 0.0
        %1052 = vmatprep.subr.mxu0 0.0
        %1053 = vmatpush1.msra.mxu0 0.0
        %1054 = vmatprep.subr.mxu0 0.0
        %1055 = vmatpush1.msra.mxu0 0.0
        %1056 = vmatprep.subr.mxu0 0.0
        %1057 = vmatpush1.msra.mxu0 0.0
        %1058 = vmatprep.subr.mxu0 0.0
        %1059 = vmatpush1.msra.mxu0 0.0
        %1060 = vmatprep.subr.mxu0 0.0
        %1061 = vmatpush1.msra.mxu0 0.0
        %1062 = vmatprep.subr.mxu0 0.0
        %1063 = vmatpush1.msra.mxu0 0.0
        %1064 = vmatprep.subr.mxu0 0.0
        %1065 = vmatpush1.msra.mxu0 0.0
        %1066 = vmatprep.subr.mxu0 0.0
        %1067 = vmatpush1.msra.mxu0 0.0
        %1068 = vmatprep.subr.mxu0 0.0
        %1069 = vmatpush1.msra.mxu0 0.0
        %1070 = vmatprep.subr.mxu0 0.0
        %1071 = vmatpush1.msra.mxu0 0.0
        %1072 = vmatprep.subr.mxu0 0.0
        %1073 = vmatpush1.msra.mxu0 0.0
        %1074 = vmatprep.subr.mxu0 0.0
        %1075 = vmatpush1.msra.mxu0 0.0
        %1076 = vmatprep.subr.mxu0 0.0
        %1077 = vmatpush1.msra.mxu0 0.0
        %1078 = vmatprep.mubr.f32.mxu0 0.0
        %1079 = vmatmul.mubr.f32.gmra.mrb[0].mxu0 %v1012
        %v1080 = vpop.f32.mrb[0].mxu0
        %v1081 = vadd.f32 %v1010, %v1080
        %v1082 = vpop.f32.mrb[0].mxu0
        %1083 = vdwg.mxu0
        %1084 = vst [vmem:[%s202] sm:$0x1] %v1081
        %s1085 = sand.u32 %s116, 1
        %s1086 = scalar_lea.sflag [#allocation4], %s1085
        %s1087 = sand.u32 %s116, 1
        %s1088 = scalar_lea.vmem [#allocation5], %s1087
        // Predicated region
        $region41: #{tpu_custom_call.1} parent=35 // pred_check
          %p1089 = pneg %p126
        $region42: #{tpu_custom_call.1} parent=35 // pred_check_branch
          %1091 = sbr.rel (%p1089) target = $region44
        $region43: #{tpu_custom_call.1} parent=35 // pred_region
          %s1093 = ssub.s32 16, 16
          %1094 = vsyncadd %s1086, %s1093
          %s1095 = smul.addr %s19, 16
          %s1096 = scalar_lea.hbm %s4, %s1095
          %s1098 = sshll.u32 %s1088, 4
          %s1099 = int_to_ptr.vmem [resolvable:$true] %s1098
          %1101 = dma.vmem_to_hbm [thread:$0]  %s1099, 16, %s1096, %s1086
        $region44: #{tpu_custom_call.1} parent=35 // pred_fallthru
          _
      $region36: #{tpu_custom_call.1} parent=5 // pred_fallthru
        _
      %p1102 = scmp.le.s32.totalorder 2, %s14
      // Predicated region
      $region45: #{tpu_custom_call.1} parent=5 // pred_check
        %p1103 = pneg %p1102
      $region46: #{tpu_custom_call.1} parent=5 // pred_check_branch
        %1105 = sbr.rel (%p1103) target = $region48
      $region47: #{tpu_custom_call.1} parent=5 // pred_region
        %s1106 = ssub.s32 %s14, 2
        // Predicated region
        $region49: #{tpu_custom_call.1} parent=47 // pred_check
          %p1107 = pneg %p132
        $region50: #{tpu_custom_call.1} parent=47 // pred_check_branch
          %1109 = sbr.rel (%p1107) target = $region52
        $region51: #{tpu_custom_call.1} parent=47 // pred_region
          %s1110 = sand.u32 %s117, 1
          %s1111 = scalar_lea.sflag [#allocation4], %s1110
          %s1112 = sand.u32 %s117, 1
          %s1113 = scalar_lea.vmem [#allocation5], %s1112
          %1114 = dma.done %s1111, 16
        $region52: #{tpu_custom_call.1} parent=47 // pred_fallthru
          _
      $region48: #{tpu_custom_call.1} parent=5 // pred_fallthru
        _
    $region6: #{tpu_custom_call.1} parent=1 // loop_footer
      %s18 = sadd.s32 1, %s14
    $region7: #{tpu_custom_call.1} parent=1 // loop_footer_branch
      %13 = sbr.rel target = $region3
    $region8: #{tpu_custom_call.1} parent=1 // loop_exit
      _
    %1115 = vsyncpa [#allocation3], 1
    %s1116 = scalar_lea.sflag [#allocation3], 1
    %1117 = vsyncpa %s1116, 1
    %1118 = vsyncpa [#allocation4], 1
    %s1119 = scalar_lea.sflag [#allocation4], 1
    %1120 = vsyncpa %s1119, 1

</llo_original>
